<compile_context>
chip_gen: v5e
topology: v5e:2x2
jax: 0.10.0
libtpu: 0.0.40
codegen_flags: <defaults>
</compile_context>

<pallas_src>
import functools
import math

import jax
import jax.numpy as jnp
from jax import lax
from jax.experimental import pallas as pl
from jax.experimental.pallas import tpu as pltpu


def _ffn2d_kernel(x_ref, w1_ref, b1_ref, w2_ref, b2_ref, o_ref, acc_ref, *,
                  approximate_gelu):
    # x_ref : (1, TL, c_in)    w1_ref: (c_in, TK)    b1_ref: (1, TK)
    # w2_ref: (TK, c_out)      b2_ref: (1, c_out)    o_ref : (1, TL, c_out)
    # acc_ref: VMEM scratch (TL, c_out) f32  -- persists across the k axis.
    ki = pl.program_id(2)
    nk = pl.num_programs(2)

    @pl.when(ki == 0)
    def _():
        # Seed the accumulator with the lin2 bias (no separate zeros pass,
        # no bias add in the epilogue).
        acc_ref[...] = jnp.broadcast_to(
            b2_ref[...].astype(jnp.float32), acc_ref.shape)

    # lin1 slice: one full c_in-deep contraction (no per-chunk K=d matmuls).
    h = jnp.dot(x_ref[0], w1_ref[...], preferred_element_type=jnp.float32)
    h = h + b1_ref[...].astype(jnp.float32)

    # GELU (elementwise over hidden -> valid per hidden slice).
    if approximate_gelu:
        h = jax.nn.gelu(h, approximate=True)           # tanh path -> EUP
    else:
        h = 0.5 * h * (1.0 + lax.erf(h * (1.0 / math.sqrt(2.0))))  # exact

    # lin2 partial: one wide (TL, TK) @ (TK, c_out) matmul, f32 accumulate.
    acc_ref[...] += jnp.dot(h.astype(w2_ref.dtype), w2_ref[...],
                            preferred_element_type=jnp.float32)

    @pl.when(ki == nk - 1)
    def _():
        # Lane-dense store of the whole (TL, c_out) tile.
        o_ref[0] = acc_ref[...].astype(o_ref.dtype)


def feed_forward_2d(x, w1, b1, w2, b2, *, tl=None, tk=None,
                    use_bf16_matmul=False, approximate_gelu=False):
    """x: (b, n, l, d).  w1: (n*d, H), b1: (H,), w2: (H, c_out), b2: (c_out,).

    Returns (b, c_out // d, l, d) -- identical to the PyTorch module's forward.
    """
    b, n, l, d = x.shape
    c_in = n * d
    hidden = w1.shape[1]
    c_out = w2.shape[1]
    assert w1.shape == (c_in, hidden)
    assert b1.shape == (hidden,)
    assert w2.shape == (hidden, c_out)
    assert b2.shape == (c_out,)
    assert c_out % d == 0
    nout = c_out // d

    # ---- generation-aware VMEM budget / default tiles -----------------------
    try:
        vmem_cap = pltpu.get_tpu_info().vmem_capacity_bytes
    except Exception:                      # conservative (v7x per-TC) fallback
        vmem_cap = 64 * 1024 * 1024
    vmem_limit = min(int(vmem_cap * 3 // 4), 100 * 1024 * 1024)

    if tl is None:
        tl = 512 if vmem_cap >= 128 * 1024 * 1024 else 256
    tl = min(tl, l)
    if tl % 8 != 0:
        tl = (tl // 8) * 8                 # round DOWN to a sublane multiple
        if tl == 0:
            tl = l                         # very short sequences: one block
    # v7x has 2 TensorCores: make sure a b==1 workload still splits along l.
    if b == 1 and tl >= l and l >= 16:
        tl = max(8, (pl.cdiv(l, 2) // 8) * 8)

    # Hidden tile: multiple of 128 that divides hidden (padding the reduction
    # axis would contract over garbage), else no split.
    if tk is None:
        tk = 512
    tk_cap = min(tk, hidden)
    divisors = [k for k in range(128, tk_cap + 1, 128) if hidden % k == 0]
    tk = max(divisors) if divisors else hidden
    nk = hidden // tk

    # ---- wrapper-side layout plumbing (activations are lane-dense in-kernel)
    # Folds the PyTorch transpose(1,2).reshape(b,l,n*d) into one cheap pass.
    # TODO(synk): for d >= 128 the native (b, n, l, d) layout is already
    # lane-dense; skip this transpose and do n chunked K=d matmuls in-kernel.
    xt = jnp.transpose(x, (0, 2, 1, 3)).reshape(b, l, c_in)

    if use_bf16_matmul:
        # Pre-cast once here (not per grid step in the kernel); also halves
        # the weight/activation DMA + VMEM footprint.
        xt = xt.astype(jnp.bfloat16)
        w1c = w1.astype(jnp.bfloat16)
        w2c = w2.astype(jnp.bfloat16)
    else:
        w1c, w2c = w1, w2
    b1r = b1.reshape(1, hidden).astype(jnp.float32)
    b2r = b2.reshape(1, c_out).astype(jnp.float32)

    kernel = functools.partial(_ffn2d_kernel, approximate_gelu=approximate_gelu)

    grid = (b, pl.cdiv(l, tl), nk)

    out_lanes = pl.pallas_call(
        kernel,
        out_shape=jax.ShapeDtypeStruct((b, l, c_out), x.dtype),
        grid_spec=pltpu.PrefetchScalarGridSpec(
            num_scalar_prefetch=0,
            grid=grid,
            in_specs=[
                # streamed activation tile (constant across the k axis)
                pl.BlockSpec((1, tl, c_in), lambda bi, ti, ki: (bi, ti, 0)),
                # streamed hidden slices of the weights / lin1 bias
                pl.BlockSpec((c_in, tk), lambda bi, ti, ki: (0, ki)),
                pl.BlockSpec((1, tk), lambda bi, ti, ki: (0, ki)),
                pl.BlockSpec((tk, c_out), lambda bi, ti, ki: (ki, 0)),
                # lin2 bias (tiny, constant)
                pl.BlockSpec((1, c_out), lambda bi, ti, ki: (0, 0)),
            ],
            out_specs=pl.BlockSpec((1, tl, c_out),
                                   lambda bi, ti, ki: (bi, ti, 0)),
            scratch_shapes=[pltpu.VMEM((tl, c_out), jnp.float32)],
        ),
        compiler_params=pltpu.CompilerParams(
            dimension_semantics=("parallel", "parallel", "arbitrary"),
            vmem_limit_bytes=vmem_limit,
        ),
    )(xt, w1c, b1r, w2c, b2r)

    # Final layout plumbing back to the module's (b, c_out//d, l, d) output.
    return jnp.transpose(out_lanes.reshape(b, l, nout, d), (0, 2, 1, 3))


def reference(x, w1, b1, w2, b2):
    b, n, l, d = x.shape
    o = jnp.transpose(x, (0, 2, 1, 3)).reshape(b, l, n * d)
    o = o @ w1 + b1
    o = jax.nn.gelu(o, approximate=False)
    o = o @ w2 + b2
    o = o.reshape(b, l, -1, d)
    return jnp.transpose(o, (0, 2, 1, 3))


if __name__ == "__main__":
    # Module config: in_features=16 => 2*in_features=32, hidden=4*32=128,
    # out_features defaults to 2*in_features=32.
    in_features = 16
    wide_factor = 4
    c_in = 2 * in_features           # 32  (must equal n*d)
    hidden = wide_factor * c_in      # 128
    c_out = 2 * in_features          # 32

    b, n, l, d = 2, 2, 8, in_features   # n*d == 32 == 2*in_features

    key = jax.random.PRNGKey(0)
    kx, kw1, kb1, kw2, kb2 = jax.random.split(key, 5)

    x = jax.random.normal(kx, (b, n, l, d), dtype=jnp.float32)

    # Deterministic parameter init (PyTorch-style uniform fan-in bounds).
    bound1 = 1.0 / math.sqrt(c_in)
    w1 = jax.random.uniform(kw1, (c_in, hidden), jnp.float32, -bound1, bound1)
    b1 = jax.random.uniform(kb1, (hidden,), jnp.float32, -bound1, bound1)
    bound2 = 1.0 / math.sqrt(hidden)
    w2 = jax.random.uniform(kw2, (hidden, c_out), jnp.float32, -bound2, bound2)
    b2 = jax.random.uniform(kb2, (c_out,), jnp.float32, -bound2, bound2)

    use_bf16 = False                      # f32 path meets the 1e-5 check
    out = feed_forward_2d(x, w1, b1, w2, b2, use_bf16_matmul=use_bf16)
    out = jax.block_until_ready(out)

    ref = reference(x, w1, b1, w2, b2)
    assert out.shape == (b, c_out // d, l, d), out.shape
    tol = 2e-2 if use_bf16 else 1e-5      # gate tolerance on the matmul dtype
    assert jnp.allclose(out, ref, atol=tol, rtol=tol), float(
        jnp.max(jnp.abs(out - ref)))

    print("KERNEL_OK")
</pallas_src>

<mosaic_0001>
module attributes {stable_mosaic.version = 11 : i64} {
  func.func @_ffn2d_kernel(%arg0: i32, %arg1: i32, %arg2: i32, %arg3: memref<1x8x32xf32, #tpu.memory_space<vmem>>, %arg4: memref<32x128xf32, #tpu.memory_space<vmem>>, %arg5: memref<1x128xf32, #tpu.memory_space<vmem>>, %arg6: memref<128x32xf32, #tpu.memory_space<vmem>>, %arg7: memref<1x32xf32, #tpu.memory_space<vmem>>, %arg8: memref<1x8x32xf32, #tpu.memory_space<vmem>>, %arg9: memref<8x32xf32, #tpu.memory_space<vmem>>) attributes {dimension_semantics = [#tpu.dimension_semantics<parallel>, #tpu.dimension_semantics<parallel>, #tpu.dimension_semantics<arbitrary>], iteration_bounds = array<i64: 2, 1, 1>, scalar_prefetch = 0 : i64, scratch_operands = 1 : i64, tpu.core_type = #tpu.core_type<tc>, window_params = [{transform_indices = @transform_0, window_bounds = array<i64: 1, 8, 32>}, {transform_indices = @transform_1, window_bounds = array<i64: 32, 128>}, {transform_indices = @transform_2, window_bounds = array<i64: 1, 128>}, {transform_indices = @transform_3, window_bounds = array<i64: 128, 32>}, {pipeline_mode = #tpu.pipeline_mode<synchronous>, transform_indices = @transform_4, window_bounds = array<i64: 1, 32>}, {transform_indices = @transform_5, window_bounds = array<i64: 1, 8, 32>}]} {
    %c0_i32 = arith.constant 0 : i32
    %0 = arith.cmpi eq, %arg2, %c0_i32 : i32
    %1 = arith.extui %0 : i1 to i32
    %c0_i32_0 = arith.constant 0 : i32
    %2 = arith.cmpi ne, %1, %c0_i32_0 : i32
    scf.if %2 {
      %c0_19 = arith.constant 0 : index
      %c0_20 = arith.constant 0 : index
      %26 = vector.load %arg7[%c0_19, %c0_20] : memref<1x32xf32, #tpu.memory_space<vmem>>, vector<1x32xf32>
      %27 = vector.shape_cast %26 : vector<1x32xf32> to vector<1x32xf32>
      %28 = vector.broadcast %27 : vector<1x32xf32> to vector<8x32xf32>
      %c0_21 = arith.constant 0 : index
      %c0_22 = arith.constant 0 : index
      %29 = vector.load %arg9[%c0_21, %c0_22] : memref<8x32xf32, #tpu.memory_space<vmem>>, vector<8x32xf32>
      tpu.vector_store %arg9[%c0_21, %c0_22], %28 {strides = array<i32>} : memref<8x32xf32, #tpu.memory_space<vmem>>, vector<8x32xf32>,
    } else {
    }
    %c0 = arith.constant 0 : index
    %c0_1 = arith.constant 0 : index
    %c0_2 = arith.constant 0 : index
    %3 = vector.load %arg3[%c0, %c0_1, %c0_2] : memref<1x8x32xf32, #tpu.memory_space<vmem>>, vector<1x8x32xf32>
    %4 = vector.shape_cast %3 : vector<1x8x32xf32> to vector<8x32xf32>
    %c0_3 = arith.constant 0 : index
    %c0_4 = arith.constant 0 : index
    %5 = vector.load %arg4[%c0_3, %c0_4] : memref<32x128xf32, #tpu.memory_space<vmem>>, vector<32x128xf32>
    %cst = arith.constant dense<0.000000e+00> : vector<8x128xf32>
    %6 = tpu.matmul %4, %5, %cst {dimension_numbers = #tpu.dot_dimension_numbers<[1], [0], [0], [1], [0, 0, 1, 1], [], []>} : vector<8x32xf32>, vector<32x128xf32>, vector<8x128xf32> -> vector<8x128xf32>
    %c0_5 = arith.constant 0 : index
    %c0_6 = arith.constant 0 : index
    %7 = vector.load %arg5[%c0_5, %c0_6] : memref<1x128xf32, #tpu.memory_space<vmem>>, vector<1x128xf32>
    %8 = vector.broadcast %7 : vector<1x128xf32> to vector<8x128xf32>
    %9 = arith.addf %6, %8 : vector<8x128xf32>
    %cst_7 = arith.constant 5.000000e-01 : f32
    %10 = vector.broadcast %cst_7 : f32 to vector<8x128xf32>
    %11 = arith.mulf %10, %9 : vector<8x128xf32>
    %cst_8 = arith.constant 0.707106769 : f32
    %12 = vector.broadcast %cst_8 : f32 to vector<8x128xf32>
    %13 = arith.mulf %9, %12 : vector<8x128xf32>
    %14 = math.erf %13 : vector<8x128xf32>
    %cst_9 = arith.constant 1.000000e+00 : f32
    %15 = vector.broadcast %cst_9 : f32 to vector<8x128xf32>
    %16 = arith.addf %15, %14 : vector<8x128xf32>
    %17 = arith.mulf %11, %16 : vector<8x128xf32>
    %c0_10 = arith.constant 0 : index
    %c0_11 = arith.constant 0 : index
    %18 = vector.load %arg9[%c0_10, %c0_11] : memref<8x32xf32, #tpu.memory_space<vmem>>, vector<8x32xf32>
    %c0_12 = arith.constant 0 : index
    %c0_13 = arith.constant 0 : index
    %19 = vector.load %arg6[%c0_12, %c0_13] : memref<128x32xf32, #tpu.memory_space<vmem>>, vector<128x32xf32>
    %cst_14 = arith.constant dense<0.000000e+00> : vector<8x32xf32>
    %20 = tpu.matmul %17, %19, %cst_14 {dimension_numbers = #tpu.dot_dimension_numbers<[1], [0], [0], [1], [0, 0, 1, 1], [], []>} : vector<8x128xf32>, vector<128x32xf32>, vector<8x32xf32> -> vector<8x32xf32>
    %21 = arith.addf %18, %20 : vector<8x32xf32>
    %c0_15 = arith.constant 0 : index
    %c0_16 = arith.constant 0 : index
    %22 = vector.load %arg9[%c0_15, %c0_16] : memref<8x32xf32, #tpu.memory_space<vmem>>, vector<8x32xf32>
    tpu.vector_store %arg9[%c0_15, %c0_16], %21 {strides = array<i32>} : memref<8x32xf32, #tpu.memory_space<vmem>>, vector<8x32xf32>,
    %c0_i32_17 = arith.constant 0 : i32
    %23 = arith.cmpi eq, %arg2, %c0_i32_17 : i32
    %24 = arith.extui %23 : i1 to i32
    %c0_i32_18 = arith.constant 0 : i32
    %25 = arith.cmpi ne, %24, %c0_i32_18 : i32
    scf.if %25 {
      %c0_19 = arith.constant 0 : index
      %c0_20 = arith.constant 0 : index
      %26 = vector.load %arg9[%c0_19, %c0_20] : memref<8x32xf32, #tpu.memory_space<vmem>>, vector<8x32xf32>
      %c0_21 = arith.constant 0 : index
      %c0_22 = arith.constant 0 : index
      %c0_23 = arith.constant 0 : index
      %27 = vector.load %arg8[%c0_21, %c0_22, %c0_23] : memref<1x8x32xf32, #tpu.memory_space<vmem>>, vector<1x8x32xf32>
      %28 = vector.shape_cast %27 : vector<1x8x32xf32> to vector<8x32xf32>
      %29 = vector.shape_cast %26 : vector<8x32xf32> to vector<1x8x32xf32>
      tpu.vector_store %arg8[%c0_21, %c0_22, %c0_23], %29 {strides = array<i32>} : memref<1x8x32xf32, #tpu.memory_space<vmem>>, vector<1x8x32xf32>,
    } else {
    }
    return
  }
  func.func @transform_0(%arg0: i32, %arg1: i32, %arg2: i32) -> (i32, i32, i32) {
    %c0_i32 = arith.constant 0 : i32
    %c0_i32_0 = arith.constant 0 : i32
    return %arg0, %arg1, %c0_i32 : i32, i32, i32
  }
  func.func @transform_1(%arg0: i32, %arg1: i32, %arg2: i32) -> (i32, i32) {
    %c0_i32 = arith.constant 0 : i32
    %c0_i32_0 = arith.constant 0 : i32
    return %c0_i32, %arg2 : i32, i32
  }
  func.func @transform_2(%arg0: i32, %arg1: i32, %arg2: i32) -> (i32, i32) {
    %c0_i32 = arith.constant 0 : i32
    %c0_i32_0 = arith.constant 0 : i32
    return %c0_i32, %arg2 : i32, i32
  }
  func.func @transform_3(%arg0: i32, %arg1: i32, %arg2: i32) -> (i32, i32) {
    %c0_i32 = arith.constant 0 : i32
    %c0_i32_0 = arith.constant 0 : i32
    return %arg2, %c0_i32 : i32, i32
  }
  func.func @transform_4(%arg0: i32, %arg1: i32, %arg2: i32) -> (i32, i32) {
    %c0_i32 = arith.constant 0 : i32
    %c0_i32_0 = arith.constant 0 : i32
    %c0_i32_1 = arith.constant 0 : i32
    return %c0_i32, %c0_i32_0 : i32, i32
  }
  func.func @transform_5(%arg0: i32, %arg1: i32, %arg2: i32) -> (i32, i32, i32) {
    %c0_i32 = arith.constant 0 : i32
    %c0_i32_0 = arith.constant 0 : i32
    return %arg0, %arg1, %c0_i32 : i32, i32, i32
  }
}

</mosaic_0001>

<llo_original>
// kernel: tpu_custom_call.1
$region0: #{tpu_custom_call.1}
  #allocation0 [shape = 'u32[]', space=smem, size = 0x4, offset = 0x4, fixed_abs, tag = 'smem constant byte address 0x4 - core index']
  #allocation1 [shape = 'u32[72,128]{1,0:T(1,128)}', space=vmem, size = 0x9000, scoped, tag = 'internal scratch']
  #allocation2 [shape = 'f32[8,32]{1,0:T(8,128)}', space=vmem, size = 0x1000, scoped, tag = 'scratch operand']
  %s0 = inlined_call_operand.vmem [shape: f32[2,8,32], index: 0, kind: input, shape index: {}]
  %s1 = inlined_call_operand.vmem [shape: f32[32,128], index: 1, kind: input, shape index: {}]
  %s2 = inlined_call_operand.vmem [shape: f32[1,128], index: 2, kind: input, shape index: {}]
  %s3 = inlined_call_operand.vmem [shape: f32[128,32], index: 3, kind: input, shape index: {}]
  %s4 = inlined_call_operand.vmem [shape: f32[1,32], index: 4, kind: input, shape index: {}]
  %s5 = inlined_call_operand.hbm [shape: f32[2,8,32], index: 5, kind: output, shape index: {}]
  %s6 = sld [smem:[#allocation0]]
  $region61: #{tpu_custom_call.1} parent=0
    _
  %s8 = ssub.s32 1, %s6
  %s9 = scalar_select 0, %s8, %s6
  $region1: #{tpu_custom_call.1} parent=0
    #allocation3 [shape = 'u8[8192]{0}', space=vmem, size = 0x2000, scoped, tag = 'output window, operand 0']
    #allocation4 [shape = 's32[2]{0}', space=sflag, size = 0x8, scoped, tag = 'scoped memory for tpu_custom_call.1']
    %10 = vsyncpa [#allocation4], 0
    %s11 = scalar_lea.sflag [#allocation4], 1
    %12 = vsyncpa %s11, 0
    loop: start=0, step=1, limit=4
    $region2: #{tpu_custom_call.1} parent=1 // loop_pre_header
      _
    $region3: #{tpu_custom_call.1} parent=1 // loop_header
      %s14 = sphi 0, %s18
      %p15 = scmp.ge.s32.totalorder %s14, 4
      %s21 = sphi 0, %s40
      %s22 = sphi 0, %s36
      %s23 = sphi 0, %s32
      %s24 = sphi 0, %s21
      %s25 = sphi 0, %s22
      %s26 = sphi 0, %s23
      %s27 = sphi 0, %s24
      %s28 = sphi 0, %s25
      %s29 = sphi 0, %s26
      %s45 = sphi 0, %s47
      %s48 = sphi 0, %s45
      %s49 = sphi 0, %s48
      %s65 = sphi 0, %s49
      %s71 = sphi 0, %s73
      %s74 = sphi 0, %s71
      %s75 = sphi 0, %s74
      %s91 = sphi 0, %s75
      %s97 = sphi 0, %s99
      %s100 = sphi 0, %s97
      %s101 = sphi 0, %s100
      %s117 = sphi 0, %s101
      %s123 = sphi 0, %s125
      %s126 = sphi 0, %s123
      %s127 = sphi 0, %s126
      %s143 = sphi 0, %s127
      %s147 = sphi 0, %s147
      %s149 = sphi 0, %s147
      %s150 = sphi 0, %s149
      %s164 = sphi 0, %s150
      %s172 = sphi 0, %s174
      %s175 = sphi 0, %s172
      %s176 = sphi 0, %s175
      %s192 = sphi 0, %s176
    $region4: #{tpu_custom_call.1} parent=1 // loop_header_branch
      %17 = sbr.rel (%p15) target = $region8
    $region5: #{tpu_custom_call.1} parent=1 // loop_body
      %s19 = ssub.s32 %s14, 1
      %s20 = ssub.s32 %s14, 2
      %s30 = sadd.s32 1, %s23
      %p31 = scmp.ge.s32.totalorder %s30, 1
      %s32 = scalar_select %p31, 0, %s30
      %s33 = sadd.s32 1, %s22
      %s34 = scalar_select %p31, %s33, %s22
      %p35 = scmp.ge.s32.totalorder %s34, 1
      %s36 = scalar_select %p35, 0, %s34
      %s37 = sadd.s32 1, %s21
      %s38 = scalar_select %p35, %s37, %s21
      %p39 = scmp.ge.s32.totalorder %s38, 2
      %s40 = scalar_select %p39, 0, %s38
      %s41 = ssub.s32 %s21, %s40
      %s42 = ssub.s32 %s22, %s36
      %s43 = sor.u32 %s41, %s42
      %p44 = scmp.eq.s32.totalorder %s43, 0
      %s46 = sadd.s32 %s45, 1
      %s47 = scalar_select %p44, %s45, %s46
      %p50 = pneg %p44
      %p51 = scmp.eq.s32.totalorder %s14, 1
      %p52 = por %p50, %p51
      %p53 = scmp.ne.s32.totalorder %s45, %s48
      %p54 = scmp.eq.s32.totalorder %s14, 0
      %p55 = por %p53, %p54
      %p56 = scmp.ne.s32.totalorder %s45, %s48
      %p57 = scmp.eq.s32.totalorder %s19, 1
      %p58 = por %p56, %p57
      %p59 = scmp.ne.s32.totalorder %s48, %s49
      %p60 = scmp.eq.s32.totalorder %s19, 0
      %p61 = por %p59, %p60
      %p62 = scmp.ne.s32.totalorder %s48, %s49
      %p63 = scmp.eq.s32.totalorder %s20, 1
      %p64 = por %p62, %p63
      %p66 = scmp.ne.s32.totalorder %s49, %s65
      %p67 = scmp.eq.s32.totalorder %s20, 0
      %p68 = por %p66, %p67
      %s69 = ssub.s32 %s23, %s32
      %p70 = scmp.eq.s32.totalorder %s69, 0
      %s72 = sadd.s32 %s71, 1
      %s73 = scalar_select %p70, %s71, %s72
      %p76 = pneg %p70
      %p77 = scmp.eq.s32.totalorder %s14, 1
      %p78 = por %p76, %p77
      %p79 = scmp.ne.s32.totalorder %s71, %s74
      %p80 = scmp.eq.s32.totalorder %s14, 0
      %p81 = por %p79, %p80
      %p82 = scmp.ne.s32.totalorder %s71, %s74
      %p83 = scmp.eq.s32.totalorder %s19, 1
      %p84 = por %p82, %p83
      %p85 = scmp.ne.s32.totalorder %s74, %s75
      %p86 = scmp.eq.s32.totalorder %s19, 0
      %p87 = por %p85, %p86
      %p88 = scmp.ne.s32.totalorder %s74, %s75
      %p89 = scmp.eq.s32.totalorder %s20, 1
      %p90 = por %p88, %p89
      %p92 = scmp.ne.s32.totalorder %s75, %s91
      %p93 = scmp.eq.s32.totalorder %s20, 0
      %p94 = por %p92, %p93
      %s95 = ssub.s32 %s23, %s32
      %p96 = scmp.eq.s32.totalorder %s95, 0
      %s98 = sadd.s32 %s97, 1
      %s99 = scalar_select %p96, %s97, %s98
      %p102 = pneg %p96
      %p103 = scmp.eq.s32.totalorder %s14, 1
      %p104 = por %p102, %p103
      %p105 = scmp.ne.s32.totalorder %s97, %s100
      %p106 = scmp.eq.s32.totalorder %s14, 0
      %p107 = por %p105, %p106
      %p108 = scmp.ne.s32.totalorder %s97, %s100
      %p109 = scmp.eq.s32.totalorder %s19, 1
      %p110 = por %p108, %p109
      %p111 = scmp.ne.s32.totalorder %s100, %s101
      %p112 = scmp.eq.s32.totalorder %s19, 0
      %p113 = por %p111, %p112
      %p114 = scmp.ne.s32.totalorder %s100, %s101
      %p115 = scmp.eq.s32.totalorder %s20, 1
      %p116 = por %p114, %p115
      %p118 = scmp.ne.s32.totalorder %s101, %s117
      %p119 = scmp.eq.s32.totalorder %s20, 0
      %p120 = por %p118, %p119
      %s121 = ssub.s32 %s23, %s32
      %p122 = scmp.eq.s32.totalorder %s121, 0
      %s124 = sadd.s32 %s123, 1
      %s125 = scalar_select %p122, %s123, %s124
      %p128 = pneg %p122
      %p129 = scmp.eq.s32.totalorder %s14, 1
      %p130 = por %p128, %p129
      %p131 = scmp.ne.s32.totalorder %s123, %s126
      %p132 = scmp.eq.s32.totalorder %s14, 0
      %p133 = por %p131, %p132
      %p134 = scmp.ne.s32.totalorder %s123, %s126
      %p135 = scmp.eq.s32.totalorder %s19, 1
      %p136 = por %p134, %p135
      %p137 = scmp.ne.s32.totalorder %s126, %s127
      %p138 = scmp.eq.s32.totalorder %s19, 0
      %p139 = por %p137, %p138
      %p140 = scmp.ne.s32.totalorder %s126, %s127
      %p141 = scmp.eq.s32.totalorder %s20, 1
      %p142 = por %p140, %p141
      %p144 = scmp.ne.s32.totalorder %s127, %s143
      %p145 = scmp.eq.s32.totalorder %s20, 0
      %p146 = por %p144, %p145
      %s148 = sadd.s32 %s147, 1
      %p151 = scmp.eq.s32.totalorder %s14, 1
      %p152 = scmp.ne.s32.totalorder %s147, %s149
      %p153 = scmp.eq.s32.totalorder %s14, 0
      %p154 = por %p152, %p153
      %p155 = scmp.ne.s32.totalorder %s147, %s149
      %p156 = scmp.eq.s32.totalorder %s19, 1
      %p157 = por %p155, %p156
      %p158 = scmp.ne.s32.totalorder %s149, %s150
      %p159 = scmp.eq.s32.totalorder %s19, 0
      %p160 = por %p158, %p159
      %p161 = scmp.ne.s32.totalorder %s149, %s150
      %p162 = scmp.eq.s32.totalorder %s20, 1
      %p163 = por %p161, %p162
      %p165 = scmp.ne.s32.totalorder %s150, %s164
      %p166 = scmp.eq.s32.totalorder %s20, 0
      %p167 = por %p165, %p166
      %s168 = ssub.s32 %s21, %s40
      %s169 = ssub.s32 %s22, %s36
      %s170 = sor.u32 %s168, %s169
      %p171 = scmp.eq.s32.totalorder %s170, 0
      %s173 = sadd.s32 %s172, 1
      %s174 = scalar_select %p171, %s172, %s173
      %p177 = pneg %p171
      %p178 = scmp.eq.s32.totalorder %s14, 1
      %p179 = por %p177, %p178
      %p180 = scmp.ne.s32.totalorder %s172, %s175
      %p181 = scmp.eq.s32.totalorder %s14, 0
      %p182 = por %p180, %p181
      %p183 = scmp.ne.s32.totalorder %s172, %s175
      %p184 = scmp.eq.s32.totalorder %s19, 1
      %p185 = por %p183, %p184
      %p186 = scmp.ne.s32.totalorder %s175, %s176
      %p187 = scmp.eq.s32.totalorder %s19, 0
      %p188 = por %p186, %p187
      %p189 = scmp.ne.s32.totalorder %s175, %s176
      %p190 = scmp.eq.s32.totalorder %s20, 1
      %p191 = por %p189, %p190
      %p193 = scmp.ne.s32.totalorder %s176, %s192
      %p194 = scmp.eq.s32.totalorder %s20, 0
      %p195 = por %p193, %p194
      %p196 = scmp.le.s32.totalorder 1, %s14
      %p197 = scmp.lt.s32.totalorder %s14, 3
      %p198 = pnand %p196, %p197
      %p199 = pneg %p198
      // Predicated region
      $region9: #{tpu_custom_call.1} parent=5 // pred_check
        _
      $region10: #{tpu_custom_call.1} parent=5 // pred_check_branch
        %201 = sbr.rel (%p198) target = $region12
      $region11: #{tpu_custom_call.1} parent=5 // pred_region
        %s202 = ssub.s32 %s14, 1
        // Predicated region
        $region13: #{tpu_custom_call.1} parent=11 // pred_check
          %p203 = pneg %p87
        $region14: #{tpu_custom_call.1} parent=11 // pred_check_branch
          %205 = sbr.rel (%p203) target = $region16
        $region15: #{tpu_custom_call.1} parent=11 // pred_region
          %p206 = scmp.lt.s32.totalorder %s26, 0
          %s207 = scalar_select %p206, %s26, 0
          %s208 = smul.addr %s207, 8
          %s209 = scalar_lea.vmem %s1, %s208
        $region16: #{tpu_custom_call.1} parent=11 // pred_fallthru
          _
        // Predicated region
        $region17: #{tpu_custom_call.1} parent=11 // pred_check
          %p210 = pneg %p113
        $region18: #{tpu_custom_call.1} parent=11 // pred_check_branch
          %212 = sbr.rel (%p210) target = $region20
        $region19: #{tpu_custom_call.1} parent=11 // pred_region
          %p213 = scmp.lt.s32.totalorder %s26, 0
          %s214 = scalar_select %p213, %s26, 0
          %s215 = scalar_lea.vmem %s2, %s214
        $region20: #{tpu_custom_call.1} parent=11 // pred_fallthru
          _
        // Predicated region
        $region21: #{tpu_custom_call.1} parent=11 // pred_check
          %p216 = pneg %p139
        $region22: #{tpu_custom_call.1} parent=11 // pred_check_branch
          %218 = sbr.rel (%p216) target = $region24
        $region23: #{tpu_custom_call.1} parent=11 // pred_region
          %s219 = smul.u32 16, %s26
          %p220 = scmp.lt.s32.totalorder %s219, 15
          %s221 = scalar_select %p220, %s219, 15
          %s222 = smul.addr %s221, 8
          %s223 = scalar_lea.vmem %s3, %s222
          %s224 = smul.u32 16, %s26
        $region24: #{tpu_custom_call.1} parent=11 // pred_fallthru
          _
        // Predicated region
        $region25: #{tpu_custom_call.1} parent=11 // pred_check
          %p225 = pneg %p160
        $region26: #{tpu_custom_call.1} parent=11 // pred_check_branch
          %227 = sbr.rel (%p225) target = $region28
        $region27: #{tpu_custom_call.1} parent=11 // pred_region
          _
        $region28: #{tpu_custom_call.1} parent=11 // pred_fallthru
          _
      $region12: #{tpu_custom_call.1} parent=5 // pred_fallthru
        _
      %p228 = scmp.lt.s32.totalorder %s14, 2
      // Predicated region
      $region29: #{tpu_custom_call.1} parent=5 // pred_check
        %p229 = pneg %p228
      $region30: #{tpu_custom_call.1} parent=5 // pred_check_branch
        %231 = sbr.rel (%p229) target = $region32
      $region31: #{tpu_custom_call.1} parent=5 // pred_region
        // Predicated region
        $region33: #{tpu_custom_call.1} parent=31 // pred_check
          %p232 = pneg %p55
        $region34: #{tpu_custom_call.1} parent=31 // pred_check_branch
          %234 = sbr.rel (%p232) target = $region36
        $region35: #{tpu_custom_call.1} parent=31 // pred_region
          %p235 = scmp.lt.s32.totalorder %s21, 1
          %s236 = scalar_select %p235, %s21, 1
          %p237 = scmp.lt.s32.totalorder %s22, 0
          %s238 = scalar_select %p237, %s22, 0
          %s239 = sadd.s32 %s238, %s236
          %s240 = smul.addr %s239, 8
          %s241 = scalar_lea.vmem %s0, %s240
        $region36: #{tpu_custom_call.1} parent=31 // pred_fallthru
          _
      $region32: #{tpu_custom_call.1} parent=5 // pred_fallthru
        _
      %p242 = scmp.le.s32.totalorder 1, %s14
      %p243 = scmp.lt.s32.totalorder %s14, 3
      %p244 = pnand %p242, %p243
      %p245 = pneg %p244
      // Predicated region
      $region37: #{tpu_custom_call.1} parent=5 // pred_check
        _
      $region38: #{tpu_custom_call.1} parent=5 // pred_check_branch
        %247 = sbr.rel (%p244) target = $region40
      $region39: #{tpu_custom_call.1} parent=5 // pred_region
        %s248 = ssub.s32 %s14, 1
        %p249 = scmp.lt.s32.totalorder %s24, 1
        %s250 = scalar_select %p249, %s24, 1
        %p251 = scmp.lt.s32.totalorder %s25, 0
        %s252 = scalar_select %p251, %s25, 0
        %s253 = sadd.s32 %s252, %s250
        %s254 = smul.addr %s253, 8
        %s255 = scalar_lea.vmem %s0, %s254
        %p256 = pneg %p61
        %p257 = pneg %p58
        %p258 = scmp.lt.s32.totalorder %s26, 0
        %s259 = scalar_select %p258, %s26, 0
        %s260 = smul.addr %s259, 8
        %s261 = scalar_lea.vmem %s1, %s260
        %p262 = pneg %p87
        %p263 = pneg %p84
        %p264 = scmp.lt.s32.totalorder %s26, 0
        %s265 = scalar_select %p264, %s26, 0
        %s266 = scalar_lea.vmem %s2, %s265
        %p267 = pneg %p113
        %p268 = pneg %p110
        %s269 = smul.u32 16, %s26
        %p270 = scmp.lt.s32.totalorder %s269, 15
        %s271 = scalar_select %p270, %s269, 15
        %s272 = smul.addr %s271, 8
        %s273 = scalar_lea.vmem %s3, %s272
        %p274 = pneg %p139
        %p275 = pneg %p136
        %p276 = pneg %p160
        %p277 = pneg %p157
        %p278 = pneg %p188
        %p279 = pneg %p185
        %s280 = sand.u32 %s175, 1
        %s281 = scalar_lea.sflag [#allocation4], %s280
        %s282 = sand.u32 %s175, 1
        %s283 = smul.addr %s282, 8
        %s284 = scalar_lea.vmem [#allocation3], %s283
        %p285 = scmp.lt.s32.totalorder %s24, 1
        %s286 = scalar_select %p285, %s24, 1
        %p287 = scmp.lt.s32.totalorder %s25, 0
        %s288 = scalar_select %p287, %s25, 0
        %s289 = sadd.s32 %s288, %s286
        %s290 = smul.addr %s289, 8
        %s291 = scalar_lea.vmem %s0, %s290
        %p292 = scmp.lt.s32.totalorder %s26, 0
        %s293 = scalar_select %p292, %s26, 0
        %s294 = smul.addr %s293, 8
        %s295 = scalar_lea.vmem %s1, %s294
        %p296 = scmp.lt.s32.totalorder %s26, 0
        %s297 = scalar_select %p296, %s26, 0
        %s298 = scalar_lea.vmem %s2, %s297
        %s299 = smul.u32 16, %s26
        %p300 = scmp.lt.s32.totalorder %s299, 15
        %s301 = scalar_select %p300, %s299, 15
        %s302 = smul.addr %s301, 8
        %s303 = scalar_lea.vmem %s3, %s302
        %s304 = smul.u32 16, %s26
        %p305 = scmp.eq.s32.totalorder %s26, 0
        // Predicated region
        $region41: #{tpu_custom_call.1} parent=39 // pred_check
          %p306 = pneg %p305
        $region42: #{tpu_custom_call.1} parent=39 // pred_check_branch
          %308 = sbr.rel (%p306) target = $region44
        $region43: #{tpu_custom_call.1} parent=39 // pred_region
          %v309 = vld [vmem:[%s4] sm:$0x1]
          %v311 = vperm.slane %v309, 0
          %vm313 = vcmask 261120
          %314 = vst.msk [vmem:[#allocation2] sm:$0xff] %vm313, %v311
        $region44: #{tpu_custom_call.1} parent=39 // pred_fallthru
          _
        %v315 = vld [vmem:[%s291] sm:$0xff]
        %v316 = vld [vmem:[%s295] sm:$0xff]
        %v317 = vld [vmem:[%s295 + $0x8] sm:$0xff]
        %v318 = vld [vmem:[%s295 + $0x10] sm:$0xff]
        %v319 = vld [vmem:[%s295 + $0x18] sm:$0xff]
        %v320 = vld [vmem:[%s298] sm:$0x1]
        %v322 = vperm.slane %v320, 0
        %vm324 = vcmask 261120
        %v326 = vsel %vm324, %v315, 0
        %328 = vmatpush.msra.mxu0 0.0
        %329 = vmatpush.msra.mxu0 0.0
        %330 = vmatpush.msra.mxu0 0.0
        %331 = vmatpush.msra.mxu0 0.0
        %332 = vmatpush.msra.mxu0 0.0
        %333 = vmatpush.msra.mxu0 0.0
        %334 = vmatpush.msra.mxu0 0.0
        %335 = vmatpush.msra.mxu0 0.0
        %336 = vmatpush.msra.mxu0 0.0
        %337 = vmatpush.msra.mxu0 0.0
        %338 = vmatpush.msra.mxu0 0.0
        %339 = vmatpush.msra.mxu0 0.0
        %340 = vmatpush.msra.mxu0 %v319
        %341 = vmatpush.msra.mxu0 %v318
        %342 = vmatpush.msra.mxu0 %v317
        %343 = vmatpush.msra.mxu0 %v316
        %344 = vmatmul.f32.gmra.mxu0 %v326
        %v345 = vpop.f32.mrf.mxu0
        %v346 = vadd.f32 %v322, %v345
        %347 = vdwg.mxu0
        %v348 = vmul.f32 %v346, 0.5
        %v349 = vmul.f32 %v346, 0.70710677
        %v350 = vmul.f32 %v349, %v349
        %v351 = vmin.f32 16.0, %v350
        %v352 = vmul.f32 %v351, 2.1237322e-06
        %v353 = vadd.f32 %v352, 0.00028619796
        %v354 = vmul.f32 %v351, %v353
        %v355 = vadd.f32 %v354, 0.0036580483
        %v356 = vmul.f32 %v351, %v355
        %v357 = vadd.f32 %v356, 0.05243302
        %v358 = vmul.f32 %v351, %v357
        %v359 = vadd.f32 %v358, 0.18741608
        %v360 = vmul.f32 %v351, %v359
        %v361 = vadd.f32 %v360, 1.1283791
        %v362 = vmul.f32 %v349, %v361
        %v363 = vmul.f32 %v351, 3.8918573e-05
        %v364 = vadd.f32 %v363, 0.001143296
        %v365 = vmul.f32 %v351, %v364
        %v366 = vadd.f32 %v365, 0.014752088
        %v367 = vmul.f32 %v351, %v366
        %v368 = vadd.f32 %v367, 0.112945676
        %v369 = vmul.f32 %v351, %v368
        %v370 = vadd.f32 %v369, 0.4994258
        %v371 = vmul.f32 %v351, %v370
        %v372 = vadd.f32 %v371, 1.0
        %v373 = vrcp.pop %v372
        %v374 = vmul.f32 %v372, %v373
        %v375 = vsub.f32 1.0, %v374
        %v376 = vmul.f32 %v373, %v375
        %v377 = vadd.f32 %v373, %v376
        %vm378 = vweird.f32 %v372
        %vm379 = vweird.f32 %v373
        %vm380 = vmor %vm378, %vm379
        %v381 = vsel %vm380, %v373, %v377
        %v382 = vand.u32 2147483647, %v372
        %vm383 = vcmp.eq.f32.partialorder %v382, 8.507059e+37
        %v384 = vand.u32 %v372, 2147483648
        %v385 = vor.u32 1.1754944e-38, %v384
        %v386 = vsel %vm383, %v385, %v381
        %v387 = vmul.f32 %v362, %v386
        %v388 = vmin.f32 %v387, 1.0
        %v389 = vmax.f32 %v388, -1.0
        %v390 = vadd.f32 %v389, 1.0
        %v391 = vmul.f32 %v348, %v390
        %v392 = vld [vmem:[#allocation2] sm:$0xff]
        %v393 = vld [vmem:[%s303] sm:$0xff]
        %v394 = vld [vmem:[%s303 + $0x8] sm:$0xff]
        %v395 = vld [vmem:[%s303 + $0x10] sm:$0xff]
        %v396 = vld [vmem:[%s303 + $0x18] sm:$0xff]
        %v397 = vld [vmem:[%s303 + $0x20] sm:$0xff]
        %v398 = vld [vmem:[%s303 + $0x28] sm:$0xff]
        %v399 = vld [vmem:[%s303 + $0x30] sm:$0xff]
        %v400 = vld [vmem:[%s303 + $0x38] sm:$0xff]
        %v401 = vld [vmem:[%s303 + $0x40] sm:$0xff]
        %v402 = vld [vmem:[%s303 + $0x48] sm:$0xff]
        %v403 = vld [vmem:[%s303 + $0x50] sm:$0xff]
        %v404 = vld [vmem:[%s303 + $0x58] sm:$0xff]
        %v405 = vld [vmem:[%s303 + $0x60] sm:$0xff]
        %v406 = vld [vmem:[%s303 + $0x68] sm:$0xff]
        %v407 = vld [vmem:[%s303 + $0x70] sm:$0xff]
        %v408 = vld [vmem:[%s303 + $0x78] sm:$0xff]
        %409 = vmatpush.msra.mxu0 %v408
        %410 = vmatpush.msra.mxu0 %v407
        %411 = vmatpush.msra.mxu0 %v406
        %412 = vmatpush.msra.mxu0 %v405
        %413 = vmatpush.msra.mxu0 %v404
        %414 = vmatpush.msra.mxu0 %v403
        %415 = vmatpush.msra.mxu0 %v402
        %416 = vmatpush.msra.mxu0 %v401
        %417 = vmatpush.msra.mxu0 %v400
        %418 = vmatpush.msra.mxu0 %v399
        %419 = vmatpush.msra.mxu0 %v398
        %420 = vmatpush.msra.mxu0 %v397
        %421 = vmatpush.msra.mxu0 %v396
        %422 = vmatpush.msra.mxu0 %v395
        %423 = vmatpush.msra.mxu0 %v394
        %424 = vmatpush.msra.mxu0 %v393
        %425 = vmatmul.f32.gmra.mxu0 %v391
        %v426 = vpop.f32.mrf.mxu0
        %v427 = vadd.f32 0.0, %v426
        %428 = vdwg.mxu0
        %v429 = vadd.f32 %v392, %v427
        %430 = vst.msk [vmem:[#allocation2] sm:$0xff] %vm324, %v429
        // Predicated region
        $region45: #{tpu_custom_call.1} parent=39 // pred_check
          %p431 = pneg %p305
        $region46: #{tpu_custom_call.1} parent=39 // pred_check_branch
          %433 = sbr.rel (%p431) target = $region48
        $region47: #{tpu_custom_call.1} parent=39 // pred_region
          %v434 = vld [vmem:[#allocation2] sm:$0xff]
          %435 = vst.msk [vmem:[%s284] sm:$0xff] %vm324, %v434
        $region48: #{tpu_custom_call.1} parent=39 // pred_fallthru
          _
        %s436 = sand.u32 %s175, 1
        %s437 = scalar_lea.sflag [#allocation4], %s436
        %s438 = sand.u32 %s175, 1
        %s439 = smul.addr %s438, 8
        %s440 = scalar_lea.vmem [#allocation3], %s439
        // Predicated region
        $region49: #{tpu_custom_call.1} parent=39 // pred_check
          %p441 = pneg %p185
        $region50: #{tpu_custom_call.1} parent=39 // pred_check_branch
          %443 = sbr.rel (%p441) target = $region52
        $region51: #{tpu_custom_call.1} parent=39 // pred_region
          %445 = vsyncadd %s437, 0
          %s446 = sadd.s32 %s25, %s24
          %s447 = smul.addr %s446, 8
          %s448 = scalar_lea.hbm %s5, %s447
          %s450 = sshll.u32 %s440, 4
          %s451 = int_to_ptr.vmem [resolvable:$true] %s450
          %s452 = sshll.u32 %s448, 4
          %s453 = int_to_ptr.hbm [resolvable:$true] %s452
          %455 = dma.vmem_to_hbm [thread:$0]  %s451, 128, %s453, %s437
        $region52: #{tpu_custom_call.1} parent=39 // pred_fallthru
          _
      $region40: #{tpu_custom_call.1} parent=5 // pred_fallthru
        _
      %p456 = scmp.le.s32.totalorder 2, %s14
      // Predicated region
      $region53: #{tpu_custom_call.1} parent=5 // pred_check
        %p457 = pneg %p456
      $region54: #{tpu_custom_call.1} parent=5 // pred_check_branch
        %459 = sbr.rel (%p457) target = $region56
      $region55: #{tpu_custom_call.1} parent=5 // pred_region
        %s460 = ssub.s32 %s14, 2
        // Predicated region
        $region57: #{tpu_custom_call.1} parent=55 // pred_check
          %p461 = pneg %p191
        $region58: #{tpu_custom_call.1} parent=55 // pred_check_branch
          %463 = sbr.rel (%p461) target = $region60
        $region59: #{tpu_custom_call.1} parent=55 // pred_region
          %s464 = sand.u32 %s176, 1
          %s465 = scalar_lea.sflag [#allocation4], %s464
          %s466 = sand.u32 %s176, 1
          %s467 = smul.addr %s466, 8
          %s468 = scalar_lea.vmem [#allocation3], %s467
          %470 = dma.done %s465, 128
        $region60: #{tpu_custom_call.1} parent=55 // pred_fallthru
          _
      $region56: #{tpu_custom_call.1} parent=5 // pred_fallthru
        _
    $region6: #{tpu_custom_call.1} parent=1 // loop_footer
      %s18 = sadd.s32 1, %s14
    $region7: #{tpu_custom_call.1} parent=1 // loop_footer_branch
      %13 = sbr.rel target = $region3
    $region8: #{tpu_custom_call.1} parent=1 // loop_exit
      _
    %471 = vsyncpa [#allocation4], 1
    %s472 = scalar_lea.sflag [#allocation4], 1
    %473 = vsyncpa %s472, 1

</llo_original>
